<compile_context>
chip_gen: v5e
topology: v5e:2x2
jax: 0.10.0
libtpu: 0.0.40
codegen_flags: <defaults>
</compile_context>

<pallas_src>
import functools

import numpy as np
import jax
import jax.numpy as jnp
from jax.experimental import pallas as pl
from jax.experimental.pallas import tpu as pltpu

_LANES = 128
_COORDS = 4
_BOXES_PER_ROW = _LANES // _COORDS        # 32 boxes per 128-lane row
_SPLIT_ROWS = 1024                        # single tile >= 2x this -> split in two (v7x)

# Linear maps on a column vector [c0, c1, c2, c3]: out = M @ in.
_TO_XYXY = {
    "xyxy":   [[1., 0., 0., 0.], [0., 1., 0., 0.], [0., 0., 1., 0.], [0., 0., 0., 1.]],
    "xywh":   [[1., 0., 0., 0.], [0., 1., 0., 0.], [1., 0., 1., 0.], [0., 1., 0., 1.]],
    "cxcywh": [[1., 0., -.5, 0.], [0., 1., 0., -.5], [1., 0., .5, 0.], [0., 1., 0., .5]],
}
_FROM_XYXY = {
    "xyxy":   [[1., 0., 0., 0.], [0., 1., 0., 0.], [0., 0., 1., 0.], [0., 0., 0., 1.]],
    "xywh":   [[1., 0., 0., 0.], [0., 1., 0., 0.], [-1., 0., 1., 0.], [0., -1., 0., 1.]],
    "cxcywh": [[.5, 0., .5, 0.], [0., .5, 0., .5], [-1., 0., 1., 0.], [0., -1., 0., 1.]],
}


def _matmul4(a, b):
    return [[sum(a[i][t] * b[t][j] for t in range(4)) for j in range(4)]
            for i in range(4)]


def _conversion_matrix(in_fmt, out_fmt, spatial_size, normalize):
    """Compile-time 4x4 matrix: fmt conversion with the normalization folded in."""
    mat = _matmul4(_FROM_XYXY[out_fmt], _TO_XYXY[in_fmt])
    if normalize:
        h, w = spatial_size
        scale = [1.0 / float(w), 1.0 / float(h), 1.0 / float(w), 1.0 / float(h)]
        mat = [[scale[i] * mat[i][j] for j in range(4)] for i in range(4)]
    return mat


def _is_identity(mat):
    return all(float(mat[i][j]) == (1.0 if i == j else 0.0)
               for i in range(4) for j in range(4))


# ----------------------------------------------------------------------------
# pltpu.roll direction: resolved once per process with a tiny probe kernel so
# the baked single-direction shifts below are correct under either convention.
# ----------------------------------------------------------------------------
_ROLL_SIGN = None


def _roll_sign():
    """+1 if pltpu.roll matches np.roll (rolled[l] == x[(l - shift) % n]), else -1."""
    global _ROLL_SIGN
    if _ROLL_SIGN is None:
        def probe(x_ref, o_ref):
            o_ref[...] = pltpu.roll(x_ref[...], 1, 1)

        x = jnp.tile(jnp.arange(_LANES, dtype=jnp.float32)[None, :], (8, 1))
        y = pl.pallas_call(
            probe, out_shape=jax.ShapeDtypeStruct((8, _LANES), jnp.float32))(x)
        _ROLL_SIGN = 1 if int(jax.device_get(y[0, 1])) == 0 else -1
    return _ROLL_SIGN


def _shift_coef_table(mat, roll_sign):
    """Bake the folded 4x4 matrix into per-shift, per-lane coefficient rows.

    Lane-flat layout: lane l of a row holds coordinate (l % 4) of box (l // 4)
    of that row.  Term out[k] += mat[k][j] * in[j] needs, at every lane with
    l % 4 == k, the value from lane l - (k - j); that is a single lane roll by
    shift = (roll_sign * (k - j)) % 128.  Lanes with other l % 4 get
    coefficient 0, which also masks roll wrap-around at the 128-lane row edges
    (4-lane box groups never straddle a row)."""
    by_shift = {}
    for k in range(_COORDS):
        for j in range(_COORDS):
            c = float(mat[k][j])
            if c == 0.0:
                continue
            s = (roll_sign * (k - j)) % _LANES
            by_shift.setdefault(s, {})[k] = c
    order = sorted(by_shift, key=lambda s: (s != 0, s))        # shift 0 first
    rows = np.zeros((len(order), _LANES), np.float32)
    for i, s in enumerate(order):
        for k, c in by_shift[s].items():
            rows[i, k::_COORDS] = c
    return tuple(int(s) for s in order), rows


def _convert_boxes_kernel(coef_ref, x_ref, o_ref, *, shifts):
    """x_ref / o_ref: (tile_rows, 128) blocks; coef_ref: (len(shifts), 128) f32.

    Body: cast to f32, one XLU roll per nonzero shift, one multiply-add per
    shift against a (1,128) coefficient row broadcast over sublanes, cast back.
    No runtime mask construction."""
    x = x_ref[...].astype(jnp.float32)
    acc = None
    for i, s in enumerate(shifts):
        xs = x if s == 0 else pltpu.roll(x, s, 1)
        term = xs * coef_ref[i:i + 1, :]
        acc = term if acc is None else acc + term
    o_ref[...] = acc.astype(o_ref.dtype)


def _round_up(x, m):
    return ((x + m - 1) // m) * m


def convert_boxes(boxes, *, in_fmt, out_fmt=None, spatial_size, normalize=False,
                  max_tile_rows=4096):
    """boxes: (N, 4) array in `in_fmt`; spatial_size = (H, W) python ints."""
    if boxes.ndim != 2 or boxes.shape[1] != _COORDS:
        raise ValueError(f"expected (N, 4) boxes, got {boxes.shape}")
    n = boxes.shape[0]
    in_fmt = in_fmt.lower()
    out_fmt = (out_fmt or in_fmt).lower()

    mat = _conversion_matrix(in_fmt, out_fmt, spatial_size, normalize)

    # torch semantics: fractional math (cxcywh midpoints, normalize) on integer
    # boxes true-divides to float; integer-only maps keep the input dtype.
    fractional = normalize or any(c != int(c) for row in mat for c in row)
    out_dtype = boxes.dtype
    if fractional and not jnp.issubdtype(boxes.dtype, jnp.floating):
        out_dtype = jnp.float32

    if _is_identity(mat) and out_dtype == boxes.dtype:
        return boxes                              # fmt unchanged, no normalize
    if n == 0:
        return boxes.astype(out_dtype)

    shifts, coef_rows = _shift_coef_table(mat, _roll_sign())
    mat_j = jnp.asarray(np.asarray(mat, dtype=np.float32))

    n_main = (n // _BOXES_PER_ROW) * _BOXES_PER_ROW
    n_rows = n_main // _BOXES_PER_ROW
    outs = []

    if n_rows > 0:
        # Row-major (n_main, 4) -> (n_rows, 128) is layout-preserving; no pad.
        src = boxes if n_main == n else boxes[:n_main]
        x2d = src.reshape(n_rows, _LANES)

        # dtype-native sublane multiple (8 f32, 16 bf16, 32 int8/fp8).
        itemsize = min(jnp.dtype(boxes.dtype).itemsize, jnp.dtype(out_dtype).itemsize)
        sub = max(8, 32 // int(itemsize))

        num_tiles = pl.cdiv(n_rows, max_tile_rows)
        if num_tiles == 1 and n_rows >= 2 * _SPLIT_ROWS:
            num_tiles = 2                         # give the 2nd TensorCore (v7x) work
        if num_tiles == 1:
            tile_rows = n_rows                    # full-array block: always legal
        else:
            tile_rows = _round_up(pl.cdiv(n_rows, num_tiles), sub)
        grid = pl.cdiv(n_rows, tile_rows)         # partial last block is masked

        kernel = functools.partial(_convert_boxes_kernel, shifts=shifts)
        out2d = pl.pallas_call(
            kernel,
            out_shape=jax.ShapeDtypeStruct((n_rows, _LANES), out_dtype),
            grid_spec=pltpu.PrefetchScalarGridSpec(
                num_scalar_prefetch=0,
                grid=(grid,),
                in_specs=[
                    pl.BlockSpec(coef_rows.shape, lambda i: (0, 0)),   # resident consts
                    pl.BlockSpec((tile_rows, _LANES), lambda i: (i, 0)),
                ],
                out_specs=pl.BlockSpec((tile_rows, _LANES), lambda i: (i, 0)),
            ),
            compiler_params=pltpu.CompilerParams(
                dimension_semantics=("parallel",)),
        )(jnp.asarray(coef_rows), x2d)
        outs.append(out2d.reshape(n_main, _COORDS))

    if n_main < n:
        # Ragged tail: < 32 boxes = one vreg of work; plain jnp is cheaper than
        # paying an extra HBM pad/slice pass over the whole array.
        tail = boxes[n_main:].astype(jnp.float32)
        outs.append((tail @ mat_j.T).astype(out_dtype))

    return outs[0] if len(outs) == 1 else jnp.concatenate(outs, axis=0)


class ConvertBoxes:
    """Mirror of the PyTorch ConvertBoxes(fmt=..., normalize=...) module.
    Only the bounding-box tensor path is implemented.
    # TODO(synk): the Transform pytree flatten/dispatch and tv_tensors
    # BoundingBoxes metadata plumbing are host-side glue with no Pallas
    # equivalent; only the numeric box transform is kernelized here."""

    def __init__(self, fmt="", normalize=False):
        self.fmt = fmt
        self.normalize = normalize

    def __call__(self, boxes, *, in_fmt, spatial_size):
        return convert_boxes(
            boxes,
            in_fmt=in_fmt,
            out_fmt=self.fmt if self.fmt else in_fmt,
            spatial_size=spatial_size,
            normalize=self.normalize,
        )


if __name__ == "__main__":
    key = jax.random.PRNGKey(0)
    H, W = 16, 16                     # spatial_size = (H, W)

    # --- test 1: xyxy -> cxcywh, normalized (lane-aligned N) -----------------
    N1 = 256
    k1, k2, k3, k4 = jax.random.split(key, 4)
    xy1 = jax.random.uniform(k1, (N1, 2), jnp.float32, minval=0.0, maxval=8.0)
    wh = jax.random.uniform(k2, (N1, 2), jnp.float32, minval=1.0, maxval=8.0)
    boxes_xyxy = jnp.concatenate([xy1, xy1 + wh], axis=-1)    # (N1, 4) xyxy

    out1 = ConvertBoxes(fmt="cxcywh", normalize=True)(
        boxes_xyxy, in_fmt="xyxy", spatial_size=(H, W))
    out1 = jax.block_until_ready(out1)

    x1, y1, x2, y2 = (boxes_xyxy[:, 0], boxes_xyxy[:, 1],
                      boxes_xyxy[:, 2], boxes_xyxy[:, 3])
    ref1 = jnp.stack([(x1 + x2) * 0.5 / W, (y1 + y2) * 0.5 / H,
                      (x2 - x1) / W, (y2 - y1) / H], axis=-1)
    assert out1.shape == (N1, 4)
    assert jnp.allclose(out1, ref1, atol=1e-5, rtol=1e-5)

    # --- test 2: xywh -> xyxy, no normalization, ragged N --------------------
    N2 = 300                          # exercises kernel prefix + jnp tail path
    xy = jax.random.uniform(k3, (N2, 2), jnp.float32, minval=0.0, maxval=8.0)
    wh2 = jax.random.uniform(k4, (N2, 2), jnp.float32, minval=1.0, maxval=8.0)
    boxes_xywh = jnp.concatenate([xy, wh2], axis=-1)           # (N2, 4) xywh

    out2 = ConvertBoxes(fmt="xyxy", normalize=False)(
        boxes_xywh, in_fmt="xywh", spatial_size=(H, W))
    out2 = jax.block_until_ready(out2)

    ref2 = jnp.stack([boxes_xywh[:, 0], boxes_xywh[:, 1],
                      boxes_xywh[:, 0] + boxes_xywh[:, 2],
                      boxes_xywh[:, 1] + boxes_xywh[:, 3]], axis=-1)
    assert out2.shape == (N2, 4)
    assert jnp.allclose(out2, ref2, atol=1e-5, rtol=1e-5)

    print("KERNEL_OK")
</pallas_src>

<mosaic_0001>
module attributes {stable_mosaic.version = 11 : i64} {
  func.func @probe(%arg0: memref<8x128xf32, #tpu.memory_space<vmem>>, %arg1: memref<8x128xf32, #tpu.memory_space<vmem>>) attributes {dimension_semantics = [], scalar_prefetch = 0 : i64, scratch_operands = 0 : i64, tpu.core_type = #tpu.core_type<tc>} {
    %c0 = arith.constant 0 : index
    %c0_0 = arith.constant 0 : index
    %0 = vector.load %arg0[%c0, %c0_0] : memref<8x128xf32, #tpu.memory_space<vmem>>, vector<8x128xf32>
    %c1_i32 = arith.constant 1 : i32
    %1 = tpu.dynamic_rotate %0 by %c1_i32 dim 1 : vector<8x128xf32>, i32 -> vector<8x128xf32>
    %c0_1 = arith.constant 0 : index
    %c0_2 = arith.constant 0 : index
    %2 = vector.load %arg1[%c0_1, %c0_2] : memref<8x128xf32, #tpu.memory_space<vmem>>, vector<8x128xf32>
    tpu.vector_store %arg1[%c0_1, %c0_2], %1 {strides = array<i32>} : memref<8x128xf32, #tpu.memory_space<vmem>>, vector<8x128xf32>,
    return
  }
}

</mosaic_0001>

<llo_original>
// kernel: tpu_custom_call.1
$region0: #{tpu_custom_call.1}
  #allocation0 [shape = 'u32[]', space=smem, size = 0x4, offset = 0x4, fixed_abs, tag = 'smem constant byte address 0x4 - core index']
  #allocation1 [shape = 'u32[72,128]{1,0:T(1,128)}', space=vmem, size = 0x9000, scoped, tag = 'internal scratch']
  %s0 = inlined_call_operand.hbm [shape: f32[8,128], index: 0, kind: input, shape index: {}]
  %s1 = inlined_call_operand.hbm [shape: f32[8,128], index: 1, kind: output, shape index: {}]
  %s2 = sld [smem:[#allocation0]]
  $region18: #{tpu_custom_call.1} parent=0
    _
  %s4 = ssub.s32 1, %s2
  %s5 = scalar_select 0, %s4, %s2
  $region1: #{tpu_custom_call.1} parent=0
    #allocation2 [shape = 'u8[4096]{0}', space=vmem, size = 0x1000, scoped, tag = 'input window, operand 0, single buffered']
    #allocation3 [shape = 's32[1]{0}', space=sflag, size = 0x4, scoped, tag = 'scoped memory for tpu_custom_call.1']
    #allocation4 [shape = 's32[1]{0}', space=sflag, size = 0x4, scoped, tag = 'scoped memory for tpu_custom_call.1']
    #allocation5 [shape = 'u8[4096]{0}', space=vmem, size = 0x1000, scoped, tag = 'output window, operand 0, single buffered']
    %6 = vsyncpa [#allocation3], 0
    %7 = vsyncpa [#allocation4], 0
    // Predicated region
    $region2: #{tpu_custom_call.1} parent=1 // pred_check
      _
    $region3: #{tpu_custom_call.1} parent=1 // pred_check_branch
      %9 = sbr.rel (0) target = $region5
    $region4: #{tpu_custom_call.1} parent=1 // pred_region
      %11 = vsyncadd [#allocation3], 0
      %s13 = sshll.u32 %s0, 4
      %s14 = int_to_ptr.hbm [resolvable:$true] %s13
      %s15 = sshll.u32 [#allocation2], 4
      %s16 = int_to_ptr.vmem [resolvable:$true] %s15
      %18 = dma.hbm_to_vmem [thread:$0]  %s14, 128, %s16, [#allocation3]
    $region5: #{tpu_custom_call.1} parent=1 // pred_fallthru
      _
    // Predicated region
    $region6: #{tpu_custom_call.1} parent=1 // pred_check
      _
    $region7: #{tpu_custom_call.1} parent=1 // pred_check_branch
      %20 = sbr.rel (0) target = $region9
    $region8: #{tpu_custom_call.1} parent=1 // pred_region
      %22 = dma.done [#allocation3], 128
    $region9: #{tpu_custom_call.1} parent=1 // pred_fallthru
      _
    %v23 = vld [vmem:[#allocation2] sm:$0xff]
    %24 = vrot.lane.b32.xlu0 %v23, 1
    %v25 = vpop.permute.xlu0 %24
    %26 = vst [vmem:[#allocation5] sm:$0xff] %v25
    // Predicated region
    $region10: #{tpu_custom_call.1} parent=1 // pred_check
      _
    $region11: #{tpu_custom_call.1} parent=1 // pred_check_branch
      %28 = sbr.rel (0) target = $region13
    $region12: #{tpu_custom_call.1} parent=1 // pred_region
      %30 = vsyncadd [#allocation4], 0
      %s32 = sshll.u32 [#allocation5], 4
      %s33 = int_to_ptr.vmem [resolvable:$true] %s32
      %s34 = sshll.u32 %s1, 4
      %s35 = int_to_ptr.hbm [resolvable:$true] %s34
      %37 = dma.vmem_to_hbm [thread:$0]  %s33, 128, %s35, [#allocation4]
    $region13: #{tpu_custom_call.1} parent=1 // pred_fallthru
      _
    // Predicated region
    $region14: #{tpu_custom_call.1} parent=1 // pred_check
      _
    $region15: #{tpu_custom_call.1} parent=1 // pred_check_branch
      %39 = sbr.rel (0) target = $region17
    $region16: #{tpu_custom_call.1} parent=1 // pred_region
      %41 = dma.done [#allocation4], 128
    $region17: #{tpu_custom_call.1} parent=1 // pred_fallthru
      _
    %42 = vsyncpa [#allocation3], 1
    %43 = vsyncpa [#allocation4], 1

</llo_original>
